<compile_context>
chip_gen: v6e
topology: v6e:2x2x1
jax: 0.10.0
libtpu: 0.0.40
codegen_flags: <defaults>
</compile_context>

<pallas_src>
import functools

import jax
import jax.numpy as jnp
from jax import lax
from jax.experimental import pallas as pl
from jax.experimental.pallas import tpu as pltpu

_BN_EPS = 1e-5  # PyTorch BatchNorm1d default eps


def _bn_train(z):
    """nn.BatchNorm1d(affine=False), training mode: per-column batch stats with
    biased variance.  Exact per column, so applying it block-wise over a column
    slice is identical to applying it over the full width."""
    mean = jnp.mean(z, axis=0, keepdims=True)
    zc = z - mean
    var = jnp.mean(zc * zc, axis=0, keepdims=True)
    return zc * lax.rsqrt(var + _BN_EPS)


def _project_bn_kernel(x_ref, w_ref, z1n_ref, z2n_ref):
    # x_ref:   (2, B, D) bf16 VMEM (resident; constant index map)
    # w_ref:   (tp, D)   bf16 VMEM (projector rows for column block i)
    # z*n_ref: (B, tp)   bf16 VMEM out (bn(z*) columns for block i)
    contract_feat = (((1,), (1,)), ((), ()))  # (B,D) x (tp,D) -> (B,tp)
    wb = w_ref[...]
    z1 = lax.dot_general(x_ref[0], wb, contract_feat,
                         preferred_element_type=jnp.float32)
    z2 = lax.dot_general(x_ref[1], wb, contract_feat,
                         preferred_element_type=jnp.float32)
    z1n_ref[...] = _bn_train(z1).astype(z1n_ref.dtype)
    z2n_ref[...] = _bn_train(z2).astype(z2n_ref.dtype)


def _bt_loss_kernel(z1_ref, z2_ref, out_ref, acc_sm, *, lambd, scale):
    # z1_ref:  (B, tp) bf16  -- bn(z1) column block i (constant over j)
    # z2_ref:  (B, tp) bf16  -- bn(z2) column block j
    # out_ref: (1, 8, 128) f32 -- lane-dense per-i partial-loss slab
    # acc_sm:  (2,) SMEM f32 -- [0] sum(c^2) over the i row, [1] diag correction
    i = pl.program_id(0)
    j = pl.program_id(1)

    @pl.when(j == 0)
    def _():
        acc_sm[0] = 0.0
        acc_sm[1] = 0.0

    z1 = z1_ref[...]
    z2 = z2_ref[...]

    # c tile = bn(z1)[:, i-block].T @ bn(z2)[:, j-block]   (tp, tp), bf16 MXU.
    c = lax.dot_general(z1, z2, (((0,), (0,)), ((), ())),
                        preferred_element_type=jnp.float32)
    acc_sm[0] += jnp.sum(c * c)

    # Diagonal blocks: + sum((diag - 1)^2) - lambd * sum(diag^2), computed
    # directly from the z blocks (no (tp,tp) iota/where).  f32 elementwise
    # products of the same bf16 values the MXU saw -> exact algebraic split.
    @pl.when(i == j)
    def _():
        z1f = z1.astype(jnp.float32)
        z2f = z2.astype(jnp.float32)
        diag = jnp.sum(z1f * z2f, axis=0, keepdims=True)  # (1, tp)
        acc_sm[1] += (jnp.sum((diag - 1.0) * (diag - 1.0))
                      - lambd * jnp.sum(diag * diag))

    # Finalize: single unmasked lane-dense store of the scaled partial.
    @pl.when(j == pl.num_programs(1) - 1)
    def _():
        total = (lambd * acc_sm[0] + acc_sm[1]) * scale
        rows = lax.broadcasted_iota(jnp.int32, out_ref.shape, 1)
        cols = lax.broadcasted_iota(jnp.int32, out_ref.shape, 2)
        out_ref[...] = jnp.where((rows == 0) & (cols == 0), total, 0.0)


def barlow_twins_loss(features, w, lambd, *, tp=256,
                      vmem_limit_bytes=48 * 1024 * 1024):
    """features: [B, 2, D] float32; w: [P, D] (PyTorch nn.Linear weight layout).

    On v5e/v6e (128 MiB VMEM) tp=512 / vmem_limit ~96 MiB is preferred for the
    real module (P=4096); the defaults here are sized for v7x (64 MiB VMEM).
    """
    B, two, D = features.shape
    assert two == 2
    P, D2 = w.shape
    assert D == D2
    tp = min(tp, P)
    assert P % tp == 0 and tp % 128 == 0
    nblk = P // tp
    # NOTE: for best layouts the real module's D (model_dim) should be a
    # multiple of 128; small D (demo) is still correct, just lane-padded.

    # The 1/256 scale is hard-coded in the PyTorch module (not tied to B).
    scale = 1.0 / 256.0

    # One-time wrapper-side layout plumbing: view axis leading, bf16 operands.
    x = jnp.transpose(features, (1, 0, 2)).astype(jnp.bfloat16)  # (2, B, D)
    w_bf = w.astype(jnp.bfloat16)

    # ---- pre-pass: projector + BatchNorm, tiled over P -----------------------
    z1n, z2n = pl.pallas_call(
        _project_bn_kernel,
        out_shape=(jax.ShapeDtypeStruct((B, P), jnp.bfloat16),
                   jax.ShapeDtypeStruct((B, P), jnp.bfloat16)),
        grid_spec=pltpu.PrefetchScalarGridSpec(
            num_scalar_prefetch=0,
            grid=(nblk,),
            in_specs=[
                pl.BlockSpec((2, B, D), lambda i: (0, 0, 0)),  # x, resident
                pl.BlockSpec((tp, D), lambda i: (i, 0)),       # w rows, block i
            ],
            out_specs=[
                pl.BlockSpec((B, tp), lambda i: (0, i)),
                pl.BlockSpec((B, tp), lambda i: (0, i)),
            ],
        ),
        compiler_params=pltpu.CompilerParams(
            dimension_semantics=("parallel",),
            vmem_limit_bytes=vmem_limit_bytes,
        ),
    )(x, w_bf)

    # ---- loss: tiled cross-correlation reduction ------------------------------
    partials = pl.pallas_call(
        functools.partial(_bt_loss_kernel, lambd=float(lambd), scale=scale),
        out_shape=jax.ShapeDtypeStruct((nblk, 8, 128), jnp.float32),
        grid_spec=pltpu.PrefetchScalarGridSpec(
            num_scalar_prefetch=0,
            grid=(nblk, nblk),
            in_specs=[
                pl.BlockSpec((B, tp), lambda i, j: (0, i)),  # bn(z1) block i
                pl.BlockSpec((B, tp), lambda i, j: (0, j)),  # bn(z2) block j
            ],
            out_specs=pl.BlockSpec((1, 8, 128), lambda i, j: (i, 0, 0)),
            scratch_shapes=[
                pltpu.SMEM((2,), jnp.float32),  # [sum(c^2), diag correction]
            ],
        ),
        compiler_params=pltpu.CompilerParams(
            dimension_semantics=("parallel", "arbitrary"),
            vmem_limit_bytes=vmem_limit_bytes,
        ),
    )(z1n, z2n)

    return jnp.sum(partials[:, 0, 0])


def _reference_loss(features, w, lambd):
    """Pure-JAX f32 reference mirroring the PyTorch forward."""
    x1 = features[:, 0, :]
    x2 = features[:, 1, :]
    z1 = x1 @ w.T
    z2 = x2 @ w.T

    def bn(z):
        mean = jnp.mean(z, axis=0, keepdims=True)
        var = jnp.mean((z - mean) ** 2, axis=0, keepdims=True)
        return (z - mean) / jnp.sqrt(var + _BN_EPS)

    c = bn(z1).T @ bn(z2)
    diag = jnp.diagonal(c)
    on_diag = jnp.sum((diag - 1.0) ** 2) * (1.0 / 256)
    off_diag = (jnp.sum(c ** 2) - jnp.sum(diag ** 2)) * (1.0 / 256)
    return on_diag + lambd * off_diag


if __name__ == "__main__":
    key = jax.random.PRNGKey(0)
    k_feat, k_w = jax.random.split(key)

    # Small shapes consistent with the module: batch=8, model_dim=32.
    # P stands in for the module's hard-coded 4096 projector width; tp=128
    # gives a 2x2 grid so diagonal and off-diagonal tile paths are exercised
    # (nblk is even, keeping both v7x TensorCores busy on the parallel axis).
    B, D, P = 8, 32, 256
    TP = 128
    lambd = 0.005

    features = jax.random.normal(k_feat, (B, 2, D), dtype=jnp.float32)
    # Deterministic init matching nn.Linear's kaiming-uniform bound 1/sqrt(fan_in).
    bound = 1.0 / (D ** 0.5)
    w = jax.random.uniform(k_w, (P, D), minval=-bound, maxval=bound,
                           dtype=jnp.float32)

    loss = barlow_twins_loss(features, w, lambd, tp=TP)
    jax.block_until_ready(loss)

    ref = _reference_loss(features, w, lambd)
    # Tolerance accounts for the bf16 MXU operands (f32 accumulation); the f32
    # reference agrees to well within this.
    assert jnp.allclose(loss, ref, rtol=5e-3, atol=5e-2), (loss, ref)

    print("KERNEL_OK")
</pallas_src>

<mosaic_0001>
module attributes {stable_mosaic.version = 11 : i64} {
  func.func @_project_bn_kernel(%arg0: i32, %arg1: memref<2x8x32xbf16, #tpu.memory_space<vmem>>, %arg2: memref<128x32xbf16, #tpu.memory_space<vmem>>, %arg3: memref<8x128xbf16, #tpu.memory_space<vmem>>, %arg4: memref<8x128xbf16, #tpu.memory_space<vmem>>) attributes {dimension_semantics = [#tpu.dimension_semantics<parallel>], iteration_bounds = array<i64: 2>, scalar_prefetch = 0 : i64, scratch_operands = 0 : i64, tpu.core_type = #tpu.core_type<tc>, window_params = [{pipeline_mode = #tpu.pipeline_mode<synchronous>, transform_indices = @transform_0, window_bounds = array<i64: 2, 8, 32>}, {transform_indices = @transform_1, window_bounds = array<i64: 128, 32>}, {transform_indices = @transform_2, window_bounds = array<i64: 8, 128>}, {transform_indices = @transform_3, window_bounds = array<i64: 8, 128>}]} {
    %c0 = arith.constant 0 : index
    %c0_0 = arith.constant 0 : index
    %0 = vector.load %arg2[%c0, %c0_0] : memref<128x32xbf16, #tpu.memory_space<vmem>>, vector<128x32xbf16>
    %c0_1 = arith.constant 0 : index
    %c0_2 = arith.constant 0 : index
    %c0_3 = arith.constant 0 : index
    %1 = vector.load %arg1[%c0_1, %c0_2, %c0_3] : memref<2x8x32xbf16, #tpu.memory_space<vmem>>, vector<1x8x32xbf16>
    %2 = vector.shape_cast %1 : vector<1x8x32xbf16> to vector<8x32xbf16>
    %cst = arith.constant dense<0.000000e+00> : vector<8x128xf32>
    %3 = tpu.matmul %2, %0, %cst {dimension_numbers = #tpu.dot_dimension_numbers<[1], [1], [0], [0], [0, 0, 1, 0], [], []>} : vector<8x32xbf16>, vector<128x32xbf16>, vector<8x128xf32> -> vector<8x128xf32>
    %c1 = arith.constant 1 : index
    %c0_4 = arith.constant 0 : index
    %c0_5 = arith.constant 0 : index
    %4 = vector.load %arg1[%c1, %c0_4, %c0_5] : memref<2x8x32xbf16, #tpu.memory_space<vmem>>, vector<1x8x32xbf16>
    %5 = vector.shape_cast %4 : vector<1x8x32xbf16> to vector<8x32xbf16>
    %cst_6 = arith.constant dense<0.000000e+00> : vector<8x128xf32>
    %6 = tpu.matmul %5, %0, %cst_6 {dimension_numbers = #tpu.dot_dimension_numbers<[1], [1], [0], [0], [0, 0, 1, 0], [], []>} : vector<8x32xbf16>, vector<128x32xbf16>, vector<8x128xf32> -> vector<8x128xf32>
    %cst_7 = arith.constant dense<0.000000e+00> : vector<128xf32>
    %7 = vector.multi_reduction <add>, %3, %cst_7 [0] : vector<8x128xf32> to vector<128xf32>
    %8 = vector.shape_cast %7 : vector<128xf32> to vector<1x128xf32>
    %cst_8 = arith.constant 8.000000e+00 : f32
    %9 = vector.broadcast %cst_8 : f32 to vector<1x128xf32>
    %10 = arith.divf %8, %9 : vector<1x128xf32>
    %11 = vector.broadcast %10 : vector<1x128xf32> to vector<8x128xf32>
    %12 = arith.subf %3, %11 : vector<8x128xf32>
    %13 = arith.mulf %12, %12 : vector<8x128xf32>
    %cst_9 = arith.constant dense<0.000000e+00> : vector<128xf32>
    %14 = vector.multi_reduction <add>, %13, %cst_9 [0] : vector<8x128xf32> to vector<128xf32>
    %15 = vector.shape_cast %14 : vector<128xf32> to vector<1x128xf32>
    %cst_10 = arith.constant 8.000000e+00 : f32
    %16 = vector.broadcast %cst_10 : f32 to vector<1x128xf32>
    %17 = arith.divf %15, %16 : vector<1x128xf32>
    %cst_11 = arith.constant 9.99999974E-6 : f32
    %18 = vector.broadcast %cst_11 : f32 to vector<1x128xf32>
    %19 = arith.addf %17, %18 : vector<1x128xf32>
    %20 = math.rsqrt %19 : vector<1x128xf32>
    %21 = vector.broadcast %20 : vector<1x128xf32> to vector<8x128xf32>
    %22 = arith.mulf %12, %21 : vector<8x128xf32>
    %23 = arith.truncf %22 : vector<8x128xf32> to vector<8x128xbf16>
    %c0_12 = arith.constant 0 : index
    %c0_13 = arith.constant 0 : index
    %24 = vector.load %arg3[%c0_12, %c0_13] : memref<8x128xbf16, #tpu.memory_space<vmem>>, vector<8x128xbf16>
    tpu.vector_store %arg3[%c0_12, %c0_13], %23 {strides = array<i32>} : memref<8x128xbf16, #tpu.memory_space<vmem>>, vector<8x128xbf16>,
    %cst_14 = arith.constant dense<0.000000e+00> : vector<128xf32>
    %25 = vector.multi_reduction <add>, %6, %cst_14 [0] : vector<8x128xf32> to vector<128xf32>
    %26 = vector.shape_cast %25 : vector<128xf32> to vector<1x128xf32>
    %cst_15 = arith.constant 8.000000e+00 : f32
    %27 = vector.broadcast %cst_15 : f32 to vector<1x128xf32>
    %28 = arith.divf %26, %27 : vector<1x128xf32>
    %29 = vector.broadcast %28 : vector<1x128xf32> to vector<8x128xf32>
    %30 = arith.subf %6, %29 : vector<8x128xf32>
    %31 = arith.mulf %30, %30 : vector<8x128xf32>
    %cst_16 = arith.constant dense<0.000000e+00> : vector<128xf32>
    %32 = vector.multi_reduction <add>, %31, %cst_16 [0] : vector<8x128xf32> to vector<128xf32>
    %33 = vector.shape_cast %32 : vector<128xf32> to vector<1x128xf32>
    %cst_17 = arith.constant 8.000000e+00 : f32
    %34 = vector.broadcast %cst_17 : f32 to vector<1x128xf32>
    %35 = arith.divf %33, %34 : vector<1x128xf32>
    %cst_18 = arith.constant 9.99999974E-6 : f32
    %36 = vector.broadcast %cst_18 : f32 to vector<1x128xf32>
    %37 = arith.addf %35, %36 : vector<1x128xf32>
    %38 = math.rsqrt %37 : vector<1x128xf32>
    %39 = vector.broadcast %38 : vector<1x128xf32> to vector<8x128xf32>
    %40 = arith.mulf %30, %39 : vector<8x128xf32>
    %41 = arith.truncf %40 : vector<8x128xf32> to vector<8x128xbf16>
    %c0_19 = arith.constant 0 : index
    %c0_20 = arith.constant 0 : index
    %42 = vector.load %arg4[%c0_19, %c0_20] : memref<8x128xbf16, #tpu.memory_space<vmem>>, vector<8x128xbf16>
    tpu.vector_store %arg4[%c0_19, %c0_20], %41 {strides = array<i32>} : memref<8x128xbf16, #tpu.memory_space<vmem>>, vector<8x128xbf16>,
    return
  }
  func.func @transform_0(%arg0: i32) -> (i32, i32, i32) {
    %c0_i32 = arith.constant 0 : i32
    %c0_i32_0 = arith.constant 0 : i32
    %c0_i32_1 = arith.constant 0 : i32
    %c0_i32_2 = arith.constant 0 : i32
    return %c0_i32, %c0_i32_0, %c0_i32_1 : i32, i32, i32
  }
  func.func @transform_1(%arg0: i32) -> (i32, i32) {
    %c0_i32 = arith.constant 0 : i32
    %c0_i32_0 = arith.constant 0 : i32
    return %arg0, %c0_i32 : i32, i32
  }
  func.func @transform_2(%arg0: i32) -> (i32, i32) {
    %c0_i32 = arith.constant 0 : i32
    %c0_i32_0 = arith.constant 0 : i32
    return %c0_i32, %arg0 : i32, i32
  }
  func.func @transform_3(%arg0: i32) -> (i32, i32) {
    %c0_i32 = arith.constant 0 : i32
    %c0_i32_0 = arith.constant 0 : i32
    return %c0_i32, %arg0 : i32, i32
  }
}

</mosaic_0001>

<llo_original>
// kernel: tpu_custom_call.1
$region0: #{tpu_custom_call.1}
  #allocation0 [shape = 'u32[]', space=smem, size = 0x4, offset = 0x4, fixed_abs, tag = 'smem constant byte address 0x4 - core index']
  #allocation1 [shape = 'u32[144,128]{1,0:T(1,128)}', space=vmem, size = 0x12000, scoped, tag = 'internal scratch']
  %s0 = inlined_call_operand.vmem [shape: bf16[2,8,32], index: 0, kind: input, shape index: {}]
  %s1 = inlined_call_operand.vmem [shape: bf16[256,32], index: 1, kind: input, shape index: {}]
  %s2 = inlined_call_operand.hbm [shape: bf16[8,256], index: 2, kind: output, shape index: {0}]
  %s3 = inlined_call_operand.hbm [shape: bf16[8,256], index: 3, kind: output, shape index: {1}]
  %4 = xla_tuple %s2, %s3
  %s5 = sld [smem:[#allocation0]]
  $region49: #{tpu_custom_call.1} parent=0
    _
  %s7 = ssub.s32 1, %s5
  %s8 = scalar_select 0, %s7, %s5
  $region1: #{tpu_custom_call.1} parent=0
    #allocation2 [shape = 'u8[4096]{0}', space=vmem, size = 0x1000, scoped, tag = 'output window, operand 0']
    #allocation3 [shape = 's32[2]{0}', space=sflag, size = 0x8, scoped, tag = 'scoped memory for tpu_custom_call.1']
    #allocation4 [shape = 'u8[4096]{0}', space=vmem, size = 0x1000, scoped, tag = 'output window, operand 1']
    #allocation5 [shape = 's32[2]{0}', space=sflag, size = 0x8, scoped, tag = 'scoped memory for tpu_custom_call.1']
    %9 = vsyncpa [#allocation3], 0
    %s10 = scalar_lea.sflag [#allocation3], 1
    %11 = vsyncpa %s10, 0
    %12 = vsyncpa [#allocation5], 0
    %s13 = scalar_lea.sflag [#allocation5], 1
    %14 = vsyncpa %s13, 0
    loop: start=0, step=1, limit=4
    $region2: #{tpu_custom_call.1} parent=1 // loop_pre_header
      _
    $region3: #{tpu_custom_call.1} parent=1 // loop_header
      %s16 = sphi 0, %s20
      %p17 = scmp.ge.s32.totalorder %s16, 4
      %s24 = sphi 0, %s24
      %s26 = sphi 0, %s24
      %s27 = sphi 0, %s26
      %s41 = sphi 0, %s27
      %s47 = sphi 0, %s49
      %s50 = sphi 0, %s47
      %s51 = sphi 0, %s50
      %s67 = sphi 0, %s51
      %s73 = sphi 0, %s75
      %s76 = sphi 0, %s73
      %s77 = sphi 0, %s76
      %s93 = sphi 0, %s77
      %s99 = sphi 0, %s101
      %s102 = sphi 0, %s99
      %s103 = sphi 0, %s102
      %s119 = sphi 0, %s103
    $region4: #{tpu_custom_call.1} parent=1 // loop_header_branch
      %19 = sbr.rel (%p17) target = $region8
    $region5: #{tpu_custom_call.1} parent=1 // loop_body
      %s21 = ssub.s32 %s16, 1
      %s22 = ssub.s32 %s16, 2
      %s23 = sadd.s32 %s16, 1
      %s25 = sadd.s32 %s24, 1
      %p28 = scmp.eq.s32.totalorder %s16, 1
      %p29 = scmp.ne.s32.totalorder %s24, %s26
      %p30 = scmp.eq.s32.totalorder %s16, 0
      %p31 = por %p29, %p30
      %p32 = scmp.ne.s32.totalorder %s24, %s26
      %p33 = scmp.eq.s32.totalorder %s21, 1
      %p34 = por %p32, %p33
      %p35 = scmp.ne.s32.totalorder %s26, %s27
      %p36 = scmp.eq.s32.totalorder %s21, 0
      %p37 = por %p35, %p36
      %p38 = scmp.ne.s32.totalorder %s26, %s27
      %p39 = scmp.eq.s32.totalorder %s22, 1
      %p40 = por %p38, %p39
      %p42 = scmp.ne.s32.totalorder %s27, %s41
      %p43 = scmp.eq.s32.totalorder %s22, 0
      %p44 = por %p42, %p43
      %s45 = ssub.s32 %s16, %s23
      %p46 = scmp.eq.s32.totalorder %s45, 0
      %s48 = sadd.s32 %s47, 1
      %s49 = scalar_select %p46, %s47, %s48
      %p52 = pneg %p46
      %p53 = scmp.eq.s32.totalorder %s16, 1
      %p54 = por %p52, %p53
      %p55 = scmp.ne.s32.totalorder %s47, %s50
      %p56 = scmp.eq.s32.totalorder %s16, 0
      %p57 = por %p55, %p56
      %p58 = scmp.ne.s32.totalorder %s47, %s50
      %p59 = scmp.eq.s32.totalorder %s21, 1
      %p60 = por %p58, %p59
      %p61 = scmp.ne.s32.totalorder %s50, %s51
      %p62 = scmp.eq.s32.totalorder %s21, 0
      %p63 = por %p61, %p62
      %p64 = scmp.ne.s32.totalorder %s50, %s51
      %p65 = scmp.eq.s32.totalorder %s22, 1
      %p66 = por %p64, %p65
      %p68 = scmp.ne.s32.totalorder %s51, %s67
      %p69 = scmp.eq.s32.totalorder %s22, 0
      %p70 = por %p68, %p69
      %s71 = ssub.s32 %s16, %s23
      %p72 = scmp.eq.s32.totalorder %s71, 0
      %s74 = sadd.s32 %s73, 1
      %s75 = scalar_select %p72, %s73, %s74
      %p78 = pneg %p72
      %p79 = scmp.eq.s32.totalorder %s16, 1
      %p80 = por %p78, %p79
      %p81 = scmp.ne.s32.totalorder %s73, %s76
      %p82 = scmp.eq.s32.totalorder %s16, 0
      %p83 = por %p81, %p82
      %p84 = scmp.ne.s32.totalorder %s73, %s76
      %p85 = scmp.eq.s32.totalorder %s21, 1
      %p86 = por %p84, %p85
      %p87 = scmp.ne.s32.totalorder %s76, %s77
      %p88 = scmp.eq.s32.totalorder %s21, 0
      %p89 = por %p87, %p88
      %p90 = scmp.ne.s32.totalorder %s76, %s77
      %p91 = scmp.eq.s32.totalorder %s22, 1
      %p92 = por %p90, %p91
      %p94 = scmp.ne.s32.totalorder %s77, %s93
      %p95 = scmp.eq.s32.totalorder %s22, 0
      %p96 = por %p94, %p95
      %s97 = ssub.s32 %s16, %s23
      %p98 = scmp.eq.s32.totalorder %s97, 0
      %s100 = sadd.s32 %s99, 1
      %s101 = scalar_select %p98, %s99, %s100
      %p104 = pneg %p98
      %p105 = scmp.eq.s32.totalorder %s16, 1
      %p106 = por %p104, %p105
      %p107 = scmp.ne.s32.totalorder %s99, %s102
      %p108 = scmp.eq.s32.totalorder %s16, 0
      %p109 = por %p107, %p108
      %p110 = scmp.ne.s32.totalorder %s99, %s102
      %p111 = scmp.eq.s32.totalorder %s21, 1
      %p112 = por %p110, %p111
      %p113 = scmp.ne.s32.totalorder %s102, %s103
      %p114 = scmp.eq.s32.totalorder %s21, 0
      %p115 = por %p113, %p114
      %p116 = scmp.ne.s32.totalorder %s102, %s103
      %p117 = scmp.eq.s32.totalorder %s22, 1
      %p118 = por %p116, %p117
      %p120 = scmp.ne.s32.totalorder %s103, %s119
      %p121 = scmp.eq.s32.totalorder %s22, 0
      %p122 = por %p120, %p121
      %p123 = scmp.le.s32.totalorder 1, %s16
      %p124 = scmp.lt.s32.totalorder %s16, 3
      %p125 = pnand %p123, %p124
      %p126 = pneg %p125
      // Predicated region
      $region9: #{tpu_custom_call.1} parent=5 // pred_check
        _
      $region10: #{tpu_custom_call.1} parent=5 // pred_check_branch
        %128 = sbr.rel (%p125) target = $region12
      $region11: #{tpu_custom_call.1} parent=5 // pred_region
        %s129 = ssub.s32 %s16, 1
        // Predicated region
        $region13: #{tpu_custom_call.1} parent=11 // pred_check
          %p130 = pneg %p37
        $region14: #{tpu_custom_call.1} parent=11 // pred_check_branch
          %132 = sbr.rel (%p130) target = $region16
        $region15: #{tpu_custom_call.1} parent=11 // pred_region
          _
        $region16: #{tpu_custom_call.1} parent=11 // pred_fallthru
          _
      $region12: #{tpu_custom_call.1} parent=5 // pred_fallthru
        _
      %p133 = scmp.lt.s32.totalorder %s16, 2
      // Predicated region
      $region17: #{tpu_custom_call.1} parent=5 // pred_check
        %p134 = pneg %p133
      $region18: #{tpu_custom_call.1} parent=5 // pred_check_branch
        %136 = sbr.rel (%p134) target = $region20
      $region19: #{tpu_custom_call.1} parent=5 // pred_region
        // Predicated region
        $region21: #{tpu_custom_call.1} parent=19 // pred_check
          %p137 = pneg %p57
        $region22: #{tpu_custom_call.1} parent=19 // pred_check_branch
          %139 = sbr.rel (%p137) target = $region24
        $region23: #{tpu_custom_call.1} parent=19 // pred_region
          %s140 = smul.u32 16, %s16
          %p141 = scmp.lt.s32.totalorder %s140, 31
          %s142 = scalar_select %p141, %s140, 31
          %s143 = smul.addr %s142, 4
          %s144 = scalar_lea.vmem %s1, %s143
          %s145 = smul.u32 16, %s16
        $region24: #{tpu_custom_call.1} parent=19 // pred_fallthru
          _
      $region20: #{tpu_custom_call.1} parent=5 // pred_fallthru
        _
      %p146 = scmp.le.s32.totalorder 1, %s16
      %p147 = scmp.lt.s32.totalorder %s16, 3
      %p148 = pnand %p146, %p147
      %p149 = pneg %p148
      // Predicated region
      $region25: #{tpu_custom_call.1} parent=5 // pred_check
        _
      $region26: #{tpu_custom_call.1} parent=5 // pred_check_branch
        %151 = sbr.rel (%p148) target = $region28
      $region27: #{tpu_custom_call.1} parent=5 // pred_region
        %s152 = ssub.s32 %s16, 1
        %p153 = pneg %p37
        %p154 = pneg %p34
        %s155 = smul.u32 16, %s21
        %p156 = scmp.lt.s32.totalorder %s155, 31
        %s157 = scalar_select %p156, %s155, 31
        %s158 = smul.addr %s157, 4
        %s159 = scalar_lea.vmem %s1, %s158
        %p160 = pneg %p63
        %p161 = pneg %p60
        %p162 = pneg %p89
        %p163 = pneg %p86
        %s164 = sand.u32 %s76, 1
        %s165 = scalar_lea.sflag [#allocation3], %s164
        %s166 = sand.u32 %s76, 1
        %s167 = smul.addr %s166, 4
        %s168 = scalar_lea.vmem [#allocation2], %s167
        %p169 = pneg %p115
        %p170 = pneg %p112
        %s171 = sand.u32 %s102, 1
        %s172 = scalar_lea.sflag [#allocation5], %s171
        %s173 = sand.u32 %s102, 1
        %s174 = smul.addr %s173, 4
        %s175 = scalar_lea.vmem [#allocation4], %s174
        %s176 = smul.u32 16, %s21
        %p177 = scmp.lt.s32.totalorder %s176, 31
        %s178 = scalar_select %p177, %s176, 31
        %s179 = smul.addr %s178, 4
        %s180 = scalar_lea.vmem %s1, %s179
        %s181 = smul.u32 16, %s21
        %v183 = vld [vmem:[%s180] sm:$0xf]
        %v184 = vld [vmem:[%s180 + $0x4] sm:$0xf]
        %v185 = vld [vmem:[%s180 + $0x8] sm:$0xf]
        %v186 = vld [vmem:[%s180 + $0xc] sm:$0xf]
        %v187 = vld [vmem:[%s180 + $0x10] sm:$0xf]
        %v188 = vld [vmem:[%s180 + $0x14] sm:$0xf]
        %v189 = vld [vmem:[%s180 + $0x18] sm:$0xf]
        %v190 = vld [vmem:[%s180 + $0x1c] sm:$0xf]
        %v191 = vld [vmem:[%s180 + $0x20] sm:$0xf]
        %v192 = vld [vmem:[%s180 + $0x24] sm:$0xf]
        %v193 = vld [vmem:[%s180 + $0x28] sm:$0xf]
        %v194 = vld [vmem:[%s180 + $0x2c] sm:$0xf]
        %v195 = vld [vmem:[%s180 + $0x30] sm:$0xf]
        %v196 = vld [vmem:[%s180 + $0x34] sm:$0xf]
        %v197 = vld [vmem:[%s180 + $0x38] sm:$0xf]
        %v198 = vld [vmem:[%s180 + $0x3c] sm:$0xf]
        %v199 = vld [vmem:[%s0] sm:$0xf]
        %v216 = vunpack.c.l.b16 %v183
        %v217 = vunpack.c.l.b16 %v184
        %v218 = vunpack.c.l.b16 %v185
        %v219 = vunpack.c.l.b16 %v186
        %v220 = vunpack.c.l.b16 %v187
        %v221 = vunpack.c.l.b16 %v188
        %v222 = vunpack.c.l.b16 %v189
        %v223 = vunpack.c.l.b16 %v190
        %v224 = vunpack.c.l.b16 %v191
        %v225 = vunpack.c.l.b16 %v192
        %v226 = vunpack.c.l.b16 %v193
        %v227 = vunpack.c.l.b16 %v194
        %v228 = vunpack.c.l.b16 %v195
        %v229 = vunpack.c.l.b16 %v196
        %v230 = vunpack.c.l.b16 %v197
        %v231 = vunpack.c.l.b16 %v198
        %v232 = vpack.c.b16 %v217, %v216
        %v233 = vpack.c.b16 %v219, %v218
        %v234 = vpack.c.b16 %v221, %v220
        %v235 = vpack.c.b16 %v223, %v222
        %v236 = vpack.c.b16 %v225, %v224
        %v237 = vpack.c.b16 %v227, %v226
        %v238 = vpack.c.b16 %v229, %v228
        %v239 = vpack.c.b16 %v231, %v230
        %vm240 = vcmask 261120
        %v242 = vsel %vm240, %v199, 0
        %v245 = vsel %vm240, %v232, 0
        %v248 = vsel %vm240, %v233, 0
        %v251 = vsel %vm240, %v234, 0
        %v254 = vsel %vm240, %v235, 0
        %v257 = vsel %vm240, %v236, 0
        %v260 = vsel %vm240, %v237, 0
        %v263 = vsel %vm240, %v238, 0
        %v266 = vsel %vm240, %v239, 0
        %268 = vmatprep.subr.bf16.mxu0 0
        %269 = vmatpush1.bf16.xpose.msra.mxu0 %v266
        %270 = vmatprep.subr.bf16.mxu0 0
        %271 = vmatpush1.bf16.xpose.msra.mxu0 %v263
        %272 = vmatprep.subr.bf16.mxu0 0
        %273 = vmatpush1.bf16.xpose.msra.mxu0 %v260
        %274 = vmatprep.subr.bf16.mxu0 0
        %275 = vmatpush1.bf16.xpose.msra.mxu0 %v257
        %276 = vmatprep.subr.bf16.mxu0 0
        %277 = vmatpush1.bf16.xpose.msra.mxu0 %v254
        %278 = vmatprep.subr.bf16.mxu0 0
        %279 = vmatpush1.bf16.xpose.msra.mxu0 %v251
        %280 = vmatprep.subr.bf16.mxu0 0
        %281 = vmatpush1.bf16.xpose.msra.mxu0 %v248
        %282 = vmatprep.subr.bf16.mxu0 0
        %283 = vmatpush1.bf16.xpose.msra.mxu0 %v245
        %284 = vmatprep.subr.bf16.mxu0 0
        %285 = vmatpush2.bf16.xpose.msra.mxu0 0
        %286 = vmatprep.subr.bf16.mxu0 0
        %287 = vmatpush2.bf16.xpose.msra.mxu0 0
        %288 = vmatprep.subr.bf16.mxu0 0
        %289 = vmatpush2.bf16.xpose.msra.mxu0 0
        %290 = vmatprep.subr.bf16.mxu0 0
        %291 = vmatpush2.bf16.xpose.msra.mxu0 0
        %292 = vmatprep.subr.bf16.mxu0 0
        %293 = vmatpush2.bf16.xpose.msra.mxu0 0
        %294 = vmatprep.subr.bf16.mxu0 0
        %295 = vmatpush2.bf16.xpose.msra.mxu0 0
        %296 = vmatprep.subr.bf16.mxu0 0
        %297 = vmatpush2.bf16.xpose.msra.mxu0 0
        %298 = vmatprep.subr.bf16.mxu0 0
        %299 = vmatpush2.bf16.xpose.msra.mxu0 0
        %300 = vmatprep.mubr.bf16.mxu0 0
        %301 = vmatmul.mubr.bf16.gmra.mxu0 %v242
        %v302 = vpop.f32.mrf.mxu0
        %v303 = vadd.f32 0.0, %v302
        %v304 = vpop.f32.mrf.mxu0
        %v305 = vpop.f32.mrf.mxu0
        %v306 = vpop.f32.mrf.mxu0
        %307 = vdwg.mxu0
        %s308 = scalar_lea.vmem %s0, 4
        %v309 = vld [vmem:[%s308] sm:$0xf]
        %v311 = vsel %vm240, %v309, 0
        %313 = vmatprep.subr.bf16.mxu0 0
        %314 = vmatpush1.bf16.xpose.msra.mxu0 %v266
        %315 = vmatprep.subr.bf16.mxu0 0
        %316 = vmatpush1.bf16.xpose.msra.mxu0 %v263
        %317 = vmatprep.subr.bf16.mxu0 0
        %318 = vmatpush1.bf16.xpose.msra.mxu0 %v260
        %319 = vmatprep.subr.bf16.mxu0 0
        %320 = vmatpush1.bf16.xpose.msra.mxu0 %v257
        %321 = vmatprep.subr.bf16.mxu0 0
        %322 = vmatpush1.bf16.xpose.msra.mxu0 %v254
        %323 = vmatprep.subr.bf16.mxu0 0
        %324 = vmatpush1.bf16.xpose.msra.mxu0 %v251
        %325 = vmatprep.subr.bf16.mxu0 0
        %326 = vmatpush1.bf16.xpose.msra.mxu0 %v248
        %327 = vmatprep.subr.bf16.mxu0 0
        %328 = vmatpush1.bf16.xpose.msra.mxu0 %v245
        %329 = vmatprep.subr.bf16.mxu0 0
        %330 = vmatpush2.bf16.xpose.msra.mxu0 0
        %331 = vmatprep.subr.bf16.mxu0 0
        %332 = vmatpush2.bf16.xpose.msra.mxu0 0
        %333 = vmatprep.subr.bf16.mxu0 0
        %334 = vmatpush2.bf16.xpose.msra.mxu0 0
        %335 = vmatprep.subr.bf16.mxu0 0
        %336 = vmatpush2.bf16.xpose.msra.mxu0 0
        %337 = vmatprep.subr.bf16.mxu0 0
        %338 = vmatpush2.bf16.xpose.msra.mxu0 0
        %339 = vmatprep.subr.bf16.mxu0 0
        %340 = vmatpush2.bf16.xpose.msra.mxu0 0
        %341 = vmatprep.subr.bf16.mxu0 0
        %342 = vmatpush2.bf16.xpose.msra.mxu0 0
        %343 = vmatprep.subr.bf16.mxu0 0
        %344 = vmatpush2.bf16.xpose.msra.mxu0 0
        %345 = vmatprep.mubr.bf16.mxu0 0
        %346 = vmatmul.mubr.bf16.gmra.mxu0 %v311
        %v347 = vpop.f32.mrf.mxu0
        %v348 = vadd.f32 0.0, %v347
        %v349 = vpop.f32.mrf.mxu0
        %v350 = vpop.f32.mrf.mxu0
        %v351 = vpop.f32.mrf.mxu0
        %352 = vdwg.mxu0
        %v353 = vrot.slane %v303, 4
        %v354 = vadd.f32 %v303, %v353
        %v355 = vrot.slane %v354, 2
        %v356 = vadd.f32 %v354, %v355
        %v357 = vrot.slane %v356, 1
        %v358 = vadd.f32 %v356, %v357
        %v359 = vrcp.pop 8.0
        %v360 = vmul.f32 %v358, %v359
        %v361 = vsub.f32 %v303, %v360
        %v362 = vmul.f32 %v361, %v361
        %v363 = vrot.slane %v362, 4
        %v364 = vadd.f32 %v362, %v363
        %v365 = vrot.slane %v364, 2
        %v366 = vadd.f32 %v364, %v365
        %v367 = vrot.slane %v366, 1
        %v368 = vadd.f32 %v366, %v367
        %v369 = vmul.f32 %v368, %v359
        %v370 = vadd.f32 %v369, 1e-05
        %v371 = vrsqrt.pop %v370
        %v372 = vmul.f32 %v361, %v371
        %v373 = vpack.c.bf16 %v372, %v372
        %374 = vst [vmem:[%s168] sm:$0xf] %v373
        %v375 = vrot.slane %v348, 4
        %v376 = vadd.f32 %v348, %v375
        %v377 = vrot.slane %v376, 2
        %v378 = vadd.f32 %v376, %v377
        %v379 = vrot.slane %v378, 1
        %v380 = vadd.f32 %v378, %v379
        %v381 = vmul.f32 %v380, %v359
        %v382 = vsub.f32 %v348, %v381
        %v383 = vmul.f32 %v382, %v382
        %v384 = vrot.slane %v383, 4
        %v385 = vadd.f32 %v383, %v384
        %v386 = vrot.slane %v385, 2
        %v387 = vadd.f32 %v385, %v386
        %v388 = vrot.slane %v387, 1
        %v389 = vadd.f32 %v387, %v388
        %v390 = vmul.f32 %v389, %v359
        %v391 = vadd.f32 %v390, 1e-05
        %v392 = vrsqrt.pop %v391
        %v393 = vmul.f32 %v382, %v392
        %v394 = vpack.c.bf16 %v393, %v393
        %395 = vst [vmem:[%s175] sm:$0xf] %v394
        %s396 = sand.u32 %s76, 1
        %s397 = scalar_lea.sflag [#allocation3], %s396
        %s398 = sand.u32 %s76, 1
        %s399 = smul.addr %s398, 4
        %s400 = scalar_lea.vmem [#allocation2], %s399
        %s401 = sand.u32 %s102, 1
        %s402 = scalar_lea.sflag [#allocation5], %s401
        %s403 = sand.u32 %s102, 1
        %s404 = smul.addr %s403, 4
        %s405 = scalar_lea.vmem [#allocation4], %s404
        // Predicated region
        $region29: #{tpu_custom_call.1} parent=27 // pred_check
          %p406 = pneg %p86
        $region30: #{tpu_custom_call.1} parent=27 // pred_check_branch
          %408 = sbr.rel (%p406) target = $region32
        $region31: #{tpu_custom_call.1} parent=27 // pred_region
          %s410 = ssub.s32 64, 64
          %411 = vsyncadd %s397, %s410
          %s412 = smul.addr %s21, 64
          %s413 = scalar_lea.hbm %s2, %s412
          %s415 = sshll.u32 %s400, 4
          %s416 = int_to_ptr.vmem [resolvable:$true] %s415
          %418 = dma.vmem_to_hbm [thread:$0]  %s416, 64, %s413, %s397
        $region32: #{tpu_custom_call.1} parent=27 // pred_fallthru
          _
        // Predicated region
        $region33: #{tpu_custom_call.1} parent=27 // pred_check
          %p419 = pneg %p112
        $region34: #{tpu_custom_call.1} parent=27 // pred_check_branch
          %421 = sbr.rel (%p419) target = $region36
        $region35: #{tpu_custom_call.1} parent=27 // pred_region
          %s423 = ssub.s32 64, 64
          %424 = vsyncadd %s402, %s423
          %s425 = smul.addr %s21, 64
          %s426 = scalar_lea.hbm %s3, %s425
          %s428 = sshll.u32 %s405, 4
          %s429 = int_to_ptr.vmem [resolvable:$true] %s428
          %431 = dma.vmem_to_hbm [thread:$0]  %s429, 64, %s426, %s402
        $region36: #{tpu_custom_call.1} parent=27 // pred_fallthru
          _
      $region28: #{tpu_custom_call.1} parent=5 // pred_fallthru
        _
      %p432 = scmp.le.s32.totalorder 2, %s16
      // Predicated region
      $region37: #{tpu_custom_call.1} parent=5 // pred_check
        %p433 = pneg %p432
      $region38: #{tpu_custom_call.1} parent=5 // pred_check_branch
        %435 = sbr.rel (%p433) target = $region40
      $region39: #{tpu_custom_call.1} parent=5 // pred_region
        %s436 = ssub.s32 %s16, 2
        // Predicated region
        $region41: #{tpu_custom_call.1} parent=39 // pred_check
          %p437 = pneg %p92
        $region42: #{tpu_custom_call.1} parent=39 // pred_check_branch
          %439 = sbr.rel (%p437) target = $region44
        $region43: #{tpu_custom_call.1} parent=39 // pred_region
          %s440 = sand.u32 %s77, 1
          %s441 = scalar_lea.sflag [#allocation3], %s440
          %s442 = sand.u32 %s77, 1
          %s443 = smul.addr %s442, 4
          %s444 = scalar_lea.vmem [#allocation2], %s443
          %445 = dma.done %s441, 64
        $region44: #{tpu_custom_call.1} parent=39 // pred_fallthru
          _
        // Predicated region
        $region45: #{tpu_custom_call.1} parent=39 // pred_check
          %p446 = pneg %p118
        $region46: #{tpu_custom_call.1} parent=39 // pred_check_branch
          %448 = sbr.rel (%p446) target = $region48
        $region47: #{tpu_custom_call.1} parent=39 // pred_region
          %s449 = sand.u32 %s103, 1
          %s450 = scalar_lea.sflag [#allocation5], %s449
          %s451 = sand.u32 %s103, 1
          %s452 = smul.addr %s451, 4
          %s453 = scalar_lea.vmem [#allocation4], %s452
          %454 = dma.done %s450, 64
        $region48: #{tpu_custom_call.1} parent=39 // pred_fallthru
          _
      $region40: #{tpu_custom_call.1} parent=5 // pred_fallthru
        _
    $region6: #{tpu_custom_call.1} parent=1 // loop_footer
      %s20 = sadd.s32 1, %s16
    $region7: #{tpu_custom_call.1} parent=1 // loop_footer_branch
      %15 = sbr.rel target = $region3
    $region8: #{tpu_custom_call.1} parent=1 // loop_exit
      _
    %455 = vsyncpa [#allocation3], 1
    %s456 = scalar_lea.sflag [#allocation3], 1
    %457 = vsyncpa %s456, 1
    %458 = vsyncpa [#allocation5], 1
    %s459 = scalar_lea.sflag [#allocation5], 1
    %460 = vsyncpa %s459, 1

</llo_original>
